<compile_context>
chip_gen: v5e
topology: v5e:2x2
jax: 0.10.0
libtpu: 0.0.40
codegen_flags: <defaults>
</compile_context>

<pallas_src>
import jax
import jax.numpy as jnp
from jax.experimental import pallas as pl
from jax.experimental.pallas import tpu as pltpu

IN_FEATURES = 8 * 4 ** 3   # 512
HIDDEN = 32
OUT = 1
LEAKY_SLOPE = 0.2


def subclf_kernel(x_ref, w1_ref, b1_ref, w2_ref, b2_ref, o_ref):
    # fc1 on the MXU: (TB, 512) @ (512, 32); f32 accumulation even for bf16 inputs.
    h = jnp.dot(x_ref[...], w1_ref[...], preferred_element_type=jnp.float32)
    h = h + b1_ref[...]                      # (1, 32) broadcast  -> VPU
    h = jnp.maximum(h, LEAKY_SLOPE * h)      # LeakyReLU(0.2), mul+max -> VPU
    # fc2 computed transposed so the result is lane-dense:
    #   y[0, t] = sum_j w2[0, j] * h[t, j]   -> (1, TB)
    y = jax.lax.dot_general(
        w2_ref[...], h,
        dimension_numbers=(((1,), (1,)), ((), ())),
        preferred_element_type=jnp.float32)
    y = y + b2_ref[...]                      # (1, 1) broadcast
    # Exact sigmoid (exp on EUP + divide); avoids approx-reciprocal drift.
    o_ref[0] = 1.0 / (1.0 + jnp.exp(-y))


def _round_up(n, m):
    return ((n + m - 1) // m) * m


def _cdiv(a, b):
    return (a + b - 1) // b


def _plan_batch_tiling(batch, tb_max):
    """Pick (TB, padded_B): large tiles to amortize per-step overhead, but at
    least 2 grid steps whenever there is enough work so v7x's two TensorCores
    both get a share of the 'parallel' batch axis."""
    tb_max = max(8, _round_up(tb_max, 8))
    b8 = _round_up(batch, 8)
    if b8 <= 8:
        return 8, 8
    steps = max(2, _cdiv(b8, tb_max))
    tb = _round_up(_cdiv(b8, steps), 8)
    steps = _cdiv(b8, tb)
    return tb, steps * tb


def subclf_forward(x, w1, b1, w2, b2, *, tb=4096, use_bf16=True):
    """y = sigmoid(leaky_relu(x @ w1 + b1, 0.2) @ w2 + b2)

    x: (B, 512); w1: (512, 32); b1: (1, 32); w2: (32, 1); b2: (1, 1)
    """
    B = x.shape[0]
    assert x.shape[1] == IN_FEATURES
    TB, Bp = _plan_batch_tiling(B, tb)
    if Bp != B:
        # Zero-pad the ragged tail; padded rows are computed and sliced off.
        x = jnp.pad(x, ((0, Bp - B), (0, 0)))

    if use_bf16:
        # Halves HBM traffic for the streamed activations and w1 (kernel is
        # bandwidth bound); accumulation stays f32 in the kernel.
        x = x.astype(jnp.bfloat16)
        w1 = w1.astype(jnp.bfloat16)
    else:
        x = x.astype(jnp.float32)
        w1 = w1.astype(jnp.float32)

    w2_row = w2.reshape(1, HIDDEN).astype(jnp.float32)
    b1 = b1.reshape(1, HIDDEN).astype(jnp.float32)
    b2 = b2.reshape(1, OUT).astype(jnp.float32)

    steps = Bp // TB
    out = pl.pallas_call(
        subclf_kernel,
        out_shape=jax.ShapeDtypeStruct((steps, 1, TB), jnp.float32),
        grid=(steps,),
        in_specs=[
            pl.BlockSpec((TB, IN_FEATURES), lambda i: (i, 0)),       # x: streamed/tiled
            pl.BlockSpec((IN_FEATURES, HIDDEN), lambda i: (0, 0)),   # w1: VMEM-resident
            pl.BlockSpec((1, HIDDEN), lambda i: (0, 0)),             # b1
            pl.BlockSpec((1, HIDDEN), lambda i: (0, 0)),             # w2 (as row)
            pl.BlockSpec((1, OUT), lambda i: (0, 0)),                # b2
        ],
        out_specs=pl.BlockSpec((1, 1, TB), lambda i: (i, 0, 0)),     # lane-dense output
        compiler_params=pltpu.CompilerParams(
            dimension_semantics=("parallel",),      # megacore sharding on v7x
            vmem_limit_bytes=48 * 1024 * 1024,      # > v5e default, < v7x physical
        ),
    )(x, w1, b1, w2_row, b2)

    # (steps, 1, TB) flattens in row-major order back to batch order.
    return out.reshape(Bp, OUT)[:B]


def init_params(key):
    # PyTorch Linear default init: U(-1/sqrt(fan_in), 1/sqrt(fan_in))
    k1, k2, k3, k4 = jax.random.split(key, 4)
    bound1 = 1.0 / jnp.sqrt(IN_FEATURES)
    bound2 = 1.0 / jnp.sqrt(HIDDEN)
    w1 = jax.random.uniform(k1, (IN_FEATURES, HIDDEN), jnp.float32, -bound1, bound1)
    b1 = jax.random.uniform(k2, (1, HIDDEN), jnp.float32, -bound1, bound1)
    w2 = jax.random.uniform(k3, (HIDDEN, OUT), jnp.float32, -bound2, bound2)
    b2 = jax.random.uniform(k4, (1, OUT), jnp.float32, -bound2, bound2)
    return w1, b1, w2, b2


def reference_forward(x, w1, b1, w2, b2):
    h = x @ w1 + b1
    h = jnp.where(h > 0, h, LEAKY_SLOPE * h)
    y = h @ w2 + b2
    return jax.nn.sigmoid(y)


if __name__ == "__main__":
    key = jax.random.PRNGKey(0)
    kx, kx2, kp = jax.random.split(key, 3)
    w1, b1, w2, b2 = init_params(kp)

    # Case 1: small batch, single grid step, default bf16 streaming path.
    B = 8
    x = jax.random.normal(kx, (B, IN_FEATURES), jnp.float32)
    out = jax.block_until_ready(subclf_forward(x, w1, b1, w2, b2))
    ref = reference_forward(x, w1, b1, w2, b2)
    assert out.shape == (B, OUT)
    assert jnp.allclose(out, ref, atol=2e-2, rtol=2e-2), float(jnp.max(jnp.abs(out - ref)))

    # Case 2: ragged batch, multi-step grid (>=2 'parallel' steps, padding,
    # lane-dense output reassembly), exact f32 path with tighter tolerance.
    B2 = 70
    x2 = jax.random.normal(kx2, (B2, IN_FEATURES), jnp.float32)
    out2 = jax.block_until_ready(
        subclf_forward(x2, w1, b1, w2, b2, tb=32, use_bf16=False))
    ref2 = reference_forward(x2, w1, b1, w2, b2)
    assert out2.shape == (B2, OUT)
    assert jnp.allclose(out2, ref2, atol=5e-3, rtol=5e-3), float(jnp.max(jnp.abs(out2 - ref2)))

    print("KERNEL_OK")
</pallas_src>

<mosaic_0001>
module attributes {stable_mosaic.version = 11 : i64} {
  func.func @subclf_kernel(%arg0: i32, %arg1: memref<8x512xbf16, #tpu.memory_space<vmem>>, %arg2: memref<512x32xbf16, #tpu.memory_space<vmem>>, %arg3: memref<1x32xf32, #tpu.memory_space<vmem>>, %arg4: memref<1x32xf32, #tpu.memory_space<vmem>>, %arg5: memref<1x1xf32, #tpu.memory_space<vmem>>, %arg6: memref<1x1x8xf32, #tpu.memory_space<vmem>>) attributes {dimension_semantics = [#tpu.dimension_semantics<parallel>], iteration_bounds = array<i64: 1>, scalar_prefetch = 0 : i64, scratch_operands = 0 : i64, tpu.core_type = #tpu.core_type<tc>, window_params = [{transform_indices = @transform_0, window_bounds = array<i64: 8, 512>}, {pipeline_mode = #tpu.pipeline_mode<synchronous>, transform_indices = @transform_1, window_bounds = array<i64: 512, 32>}, {pipeline_mode = #tpu.pipeline_mode<synchronous>, transform_indices = @transform_2, window_bounds = array<i64: 1, 32>}, {pipeline_mode = #tpu.pipeline_mode<synchronous>, transform_indices = @transform_3, window_bounds = array<i64: 1, 32>}, {pipeline_mode = #tpu.pipeline_mode<synchronous>, transform_indices = @transform_4, window_bounds = array<i64: 1, 1>}, {transform_indices = @transform_5, window_bounds = array<i64: 1, 1, 8>}]} {
    %c0 = arith.constant 0 : index
    %c0_0 = arith.constant 0 : index
    %0 = vector.load %arg1[%c0, %c0_0] : memref<8x512xbf16, #tpu.memory_space<vmem>>, vector<8x512xbf16>
    %c0_1 = arith.constant 0 : index
    %c0_2 = arith.constant 0 : index
    %1 = vector.load %arg2[%c0_1, %c0_2] : memref<512x32xbf16, #tpu.memory_space<vmem>>, vector<512x32xbf16>
    %cst = arith.constant dense<0.000000e+00> : vector<8x32xf32>
    %2 = tpu.matmul %0, %1, %cst {dimension_numbers = #tpu.dot_dimension_numbers<[1], [0], [0], [1], [0, 0, 1, 1], [], []>} : vector<8x512xbf16>, vector<512x32xbf16>, vector<8x32xf32> -> vector<8x32xf32>
    %c0_3 = arith.constant 0 : index
    %c0_4 = arith.constant 0 : index
    %3 = vector.load %arg3[%c0_3, %c0_4] : memref<1x32xf32, #tpu.memory_space<vmem>>, vector<1x32xf32>
    %4 = vector.broadcast %3 : vector<1x32xf32> to vector<8x32xf32>
    %5 = arith.addf %2, %4 : vector<8x32xf32>
    %cst_5 = arith.constant 2.000000e-01 : f32
    %6 = vector.broadcast %cst_5 : f32 to vector<8x32xf32>
    %7 = arith.mulf %6, %5 : vector<8x32xf32>
    %8 = arith.maximumf %5, %7 : vector<8x32xf32>
    %c0_6 = arith.constant 0 : index
    %c0_7 = arith.constant 0 : index
    %9 = vector.load %arg4[%c0_6, %c0_7] : memref<1x32xf32, #tpu.memory_space<vmem>>, vector<1x32xf32>
    %cst_8 = arith.constant dense<0.000000e+00> : vector<1x8xf32>
    %10 = tpu.matmul %9, %8, %cst_8 {dimension_numbers = #tpu.dot_dimension_numbers<[1], [1], [0], [0], [0, 0, 1, 0], [], []>} : vector<1x32xf32>, vector<8x32xf32>, vector<1x8xf32> -> vector<1x8xf32>
    %c0_9 = arith.constant 0 : index
    %c0_10 = arith.constant 0 : index
    %11 = vector.load %arg5[%c0_9, %c0_10] : memref<1x1xf32, #tpu.memory_space<vmem>>, vector<1x1xf32>
    %12 = vector.broadcast %11 : vector<1x1xf32> to vector<1x8xf32>
    %13 = arith.addf %10, %12 : vector<1x8xf32>
    %cst_11 = arith.constant 0.000000e+00 : f32
    %14 = vector.broadcast %cst_11 : f32 to vector<1x8xf32>
    %15 = arith.subf %14, %13 : vector<1x8xf32>
    %16 = math.exp %15 : vector<1x8xf32>
    %cst_12 = arith.constant 1.000000e+00 : f32
    %17 = vector.broadcast %cst_12 : f32 to vector<1x8xf32>
    %18 = arith.addf %17, %16 : vector<1x8xf32>
    %cst_13 = arith.constant 1.000000e+00 : f32
    %19 = vector.broadcast %cst_13 : f32 to vector<1x8xf32>
    %20 = arith.divf %19, %18 : vector<1x8xf32>
    %c0_14 = arith.constant 0 : index
    %c0_15 = arith.constant 0 : index
    %c0_16 = arith.constant 0 : index
    %21 = vector.load %arg6[%c0_14, %c0_15, %c0_16] : memref<1x1x8xf32, #tpu.memory_space<vmem>>, vector<1x1x8xf32>
    %22 = vector.shape_cast %21 : vector<1x1x8xf32> to vector<1x8xf32>
    %23 = vector.shape_cast %20 : vector<1x8xf32> to vector<1x1x8xf32>
    tpu.vector_store %arg6[%c0_14, %c0_15, %c0_16], %23 {strides = array<i32>} : memref<1x1x8xf32, #tpu.memory_space<vmem>>, vector<1x1x8xf32>,
    return
  }
  func.func @transform_0(%arg0: i32) -> (i32, i32) {
    %c0_i32 = arith.constant 0 : i32
    %c0_i32_0 = arith.constant 0 : i32
    return %arg0, %c0_i32 : i32, i32
  }
  func.func @transform_1(%arg0: i32) -> (i32, i32) {
    %c0_i32 = arith.constant 0 : i32
    %c0_i32_0 = arith.constant 0 : i32
    %c0_i32_1 = arith.constant 0 : i32
    return %c0_i32, %c0_i32_0 : i32, i32
  }
  func.func @transform_2(%arg0: i32) -> (i32, i32) {
    %c0_i32 = arith.constant 0 : i32
    %c0_i32_0 = arith.constant 0 : i32
    %c0_i32_1 = arith.constant 0 : i32
    return %c0_i32, %c0_i32_0 : i32, i32
  }
  func.func @transform_3(%arg0: i32) -> (i32, i32) {
    %c0_i32 = arith.constant 0 : i32
    %c0_i32_0 = arith.constant 0 : i32
    %c0_i32_1 = arith.constant 0 : i32
    return %c0_i32, %c0_i32_0 : i32, i32
  }
  func.func @transform_4(%arg0: i32) -> (i32, i32) {
    %c0_i32 = arith.constant 0 : i32
    %c0_i32_0 = arith.constant 0 : i32
    %c0_i32_1 = arith.constant 0 : i32
    return %c0_i32, %c0_i32_0 : i32, i32
  }
  func.func @transform_5(%arg0: i32) -> (i32, i32, i32) {
    %c0_i32 = arith.constant 0 : i32
    %c0_i32_0 = arith.constant 0 : i32
    %c0_i32_1 = arith.constant 0 : i32
    return %arg0, %c0_i32, %c0_i32_0 : i32, i32, i32
  }
}

</mosaic_0001>

<llo_original>
// kernel: tpu_custom_call.1
$region0: #{tpu_custom_call.1}
  #allocation0 [shape = 'u32[]', space=smem, size = 0x4, offset = 0x4, fixed_abs, tag = 'smem constant byte address 0x4 - core index']
  #allocation1 [shape = 'u32[72,128]{1,0:T(1,128)}', space=vmem, size = 0x9000, scoped, tag = 'internal scratch']
  #allocation2 [shape = 'f32[1,1]{1,0:T(1,128)S(1)}', space=vmem, size = 0x200, scoped, tag = 'scoped memory for tpu_custom_call.1']
  %s0 = inlined_call_operand.vmem [shape: bf16[8,512], index: 0, kind: input, shape index: {}]
  %s1 = inlined_call_operand.vmem [shape: bf16[512,32], index: 1, kind: input, shape index: {}]
  %s2 = inlined_call_operand.vmem [shape: f32[1,32], index: 2, kind: input, shape index: {}]
  %s3 = inlined_call_operand.vmem [shape: f32[1,32], index: 3, kind: input, shape index: {}]
  %s4 = inlined_call_operand.<no memory space> [shape: f32[1,1], index: 4, kind: input, shape index: {}]
  %s5 = inlined_call_operand.hbm [shape: f32[1,1,8], index: 5, kind: output, shape index: {}]
  %s6 = sld [smem:[#allocation0]]
  $region30: #{tpu_custom_call.1} parent=0
    _
  %s8 = ssub.s32 1, %s6
  %s9 = scalar_select 0, %s8, %s6
  %v10 = vstv %s4
  %11 = vst [vmem:[#allocation2] sm:$0x1] %v10
  $region1: #{tpu_custom_call.1} parent=0
    #allocation3 [shape = 'u8[512]{0}', space=vmem, size = 0x400, scoped, tag = 'output window, operand 0, single buffered']
    #allocation4 [shape = 's32[1]{0}', space=sflag, size = 0x4, scoped, tag = 'scoped memory for tpu_custom_call.1']
    %12 = vsyncpa [#allocation4], 0
    // Predicated region
    $region2: #{tpu_custom_call.1} parent=1 // pred_check
      _
    $region3: #{tpu_custom_call.1} parent=1 // pred_check_branch
      %14 = sbr.rel (0) target = $region5
    $region4: #{tpu_custom_call.1} parent=1 // pred_region
      _
    $region5: #{tpu_custom_call.1} parent=1 // pred_fallthru
      _
    // Predicated region
    $region6: #{tpu_custom_call.1} parent=1 // pred_check
      _
    $region7: #{tpu_custom_call.1} parent=1 // pred_check_branch
      %16 = sbr.rel (0) target = $region9
    $region8: #{tpu_custom_call.1} parent=1 // pred_region
      _
    $region9: #{tpu_custom_call.1} parent=1 // pred_fallthru
      _
    // Predicated region
    $region10: #{tpu_custom_call.1} parent=1 // pred_check
      _
    $region11: #{tpu_custom_call.1} parent=1 // pred_check_branch
      %18 = sbr.rel (0) target = $region13
    $region12: #{tpu_custom_call.1} parent=1 // pred_region
      _
    $region13: #{tpu_custom_call.1} parent=1 // pred_fallthru
      _
    // Predicated region
    $region14: #{tpu_custom_call.1} parent=1 // pred_check
      _
    $region15: #{tpu_custom_call.1} parent=1 // pred_check_branch
      %20 = sbr.rel (0) target = $region17
    $region16: #{tpu_custom_call.1} parent=1 // pred_region
      _
    $region17: #{tpu_custom_call.1} parent=1 // pred_fallthru
      _
    // Predicated region
    $region18: #{tpu_custom_call.1} parent=1 // pred_check
      _
    $region19: #{tpu_custom_call.1} parent=1 // pred_check_branch
      %22 = sbr.rel (0) target = $region21
    $region20: #{tpu_custom_call.1} parent=1 // pred_region
      _
    $region21: #{tpu_custom_call.1} parent=1 // pred_fallthru
      _
    %v23 = vld [vmem:[%s0] sm:$0xff]
    %v24 = vld [vmem:[%s0 + $0x8] sm:$0xff]
    %v25 = vld [vmem:[%s1] sm:$0xf]
    %v26 = vld [vmem:[%s1 + $0x4] sm:$0xf]
    %v27 = vld [vmem:[%s1 + $0x8] sm:$0xf]
    %v28 = vld [vmem:[%s1 + $0xc] sm:$0xf]
    %v29 = vld [vmem:[%s1 + $0x10] sm:$0xf]
    %v30 = vld [vmem:[%s1 + $0x14] sm:$0xf]
    %v31 = vld [vmem:[%s1 + $0x18] sm:$0xf]
    %v32 = vld [vmem:[%s1 + $0x1c] sm:$0xf]
    %v33 = vld [vmem:[%s1 + $0x20] sm:$0xf]
    %v34 = vld [vmem:[%s1 + $0x24] sm:$0xf]
    %v35 = vld [vmem:[%s1 + $0x28] sm:$0xf]
    %v36 = vld [vmem:[%s1 + $0x2c] sm:$0xf]
    %v37 = vld [vmem:[%s1 + $0x30] sm:$0xf]
    %v38 = vld [vmem:[%s1 + $0x34] sm:$0xf]
    %v39 = vld [vmem:[%s1 + $0x38] sm:$0xf]
    %v40 = vld [vmem:[%s1 + $0x3c] sm:$0xf]
    %v41 = vld [vmem:[%s1 + $0x40] sm:$0xf]
    %v42 = vld [vmem:[%s1 + $0x44] sm:$0xf]
    %v43 = vld [vmem:[%s1 + $0x48] sm:$0xf]
    %v44 = vld [vmem:[%s1 + $0x4c] sm:$0xf]
    %v45 = vld [vmem:[%s1 + $0x50] sm:$0xf]
    %v46 = vld [vmem:[%s1 + $0x54] sm:$0xf]
    %v47 = vld [vmem:[%s1 + $0x58] sm:$0xf]
    %v48 = vld [vmem:[%s1 + $0x5c] sm:$0xf]
    %v49 = vld [vmem:[%s1 + $0x60] sm:$0xf]
    %v50 = vld [vmem:[%s1 + $0x64] sm:$0xf]
    %v51 = vld [vmem:[%s1 + $0x68] sm:$0xf]
    %v52 = vld [vmem:[%s1 + $0x6c] sm:$0xf]
    %v53 = vld [vmem:[%s1 + $0x70] sm:$0xf]
    %v54 = vld [vmem:[%s1 + $0x74] sm:$0xf]
    %v55 = vld [vmem:[%s1 + $0x78] sm:$0xf]
    %v56 = vld [vmem:[%s1 + $0x7c] sm:$0xf]
    %v57 = vld [vmem:[%s1 + $0x80] sm:$0xf]
    %v58 = vld [vmem:[%s1 + $0x84] sm:$0xf]
    %v59 = vld [vmem:[%s1 + $0x88] sm:$0xf]
    %v60 = vld [vmem:[%s1 + $0x8c] sm:$0xf]
    %v61 = vld [vmem:[%s1 + $0x90] sm:$0xf]
    %v62 = vld [vmem:[%s1 + $0x94] sm:$0xf]
    %v63 = vld [vmem:[%s1 + $0x98] sm:$0xf]
    %v64 = vld [vmem:[%s1 + $0x9c] sm:$0xf]
    %v65 = vld [vmem:[%s1 + $0xa0] sm:$0xf]
    %v66 = vld [vmem:[%s1 + $0xa4] sm:$0xf]
    %v67 = vld [vmem:[%s1 + $0xa8] sm:$0xf]
    %v68 = vld [vmem:[%s1 + $0xac] sm:$0xf]
    %v69 = vld [vmem:[%s1 + $0xb0] sm:$0xf]
    %v70 = vld [vmem:[%s1 + $0xb4] sm:$0xf]
    %v71 = vld [vmem:[%s1 + $0xb8] sm:$0xf]
    %v72 = vld [vmem:[%s1 + $0xbc] sm:$0xf]
    %v73 = vld [vmem:[%s1 + $0xc0] sm:$0xf]
    %v74 = vld [vmem:[%s1 + $0xc4] sm:$0xf]
    %v75 = vld [vmem:[%s1 + $0xc8] sm:$0xf]
    %v76 = vld [vmem:[%s1 + $0xcc] sm:$0xf]
    %v77 = vld [vmem:[%s1 + $0xd0] sm:$0xf]
    %v78 = vld [vmem:[%s1 + $0xd4] sm:$0xf]
    %v79 = vld [vmem:[%s1 + $0xd8] sm:$0xf]
    %v80 = vld [vmem:[%s1 + $0xdc] sm:$0xf]
    %v81 = vld [vmem:[%s1 + $0xe0] sm:$0xf]
    %v82 = vld [vmem:[%s1 + $0xe4] sm:$0xf]
    %v83 = vld [vmem:[%s1 + $0xe8] sm:$0xf]
    %v84 = vld [vmem:[%s1 + $0xec] sm:$0xf]
    %v85 = vld [vmem:[%s1 + $0xf0] sm:$0xf]
    %v86 = vld [vmem:[%s1 + $0xf4] sm:$0xf]
    %v87 = vld [vmem:[%s1 + $0xf8] sm:$0xf]
    %v88 = vld [vmem:[%s1 + $0xfc] sm:$0xf]
    %v89 = vld [vmem:[%s2] sm:$0x1]
    %v91 = vperm.slane %v89, 0
    %v95 = vunpack.c.l.b16 %v23
    %v96 = vunpack.c.h.b16 %v23
    %v97 = vunpack.c.l.b16 %v24
    %v98 = vunpack.c.h.b16 %v24
    %v99 = vpack.c.b16 %v95, %v95
    %v100 = vpack.c.b16 %v96, %v96
    %v101 = vpack.c.b16 %v97, %v97
    %v102 = vpack.c.b16 %v98, %v98
    %v171 = vunpack.c.l.b16 %v25
    %v172 = vunpack.c.l.b16 %v26
    %v173 = vunpack.c.l.b16 %v27
    %v174 = vunpack.c.l.b16 %v28
    %v175 = vunpack.c.l.b16 %v29
    %v176 = vunpack.c.l.b16 %v30
    %v177 = vunpack.c.l.b16 %v31
    %v178 = vunpack.c.l.b16 %v32
    %v179 = vunpack.c.l.b16 %v33
    %v180 = vunpack.c.l.b16 %v34
    %v181 = vunpack.c.l.b16 %v35
    %v182 = vunpack.c.l.b16 %v36
    %v183 = vunpack.c.l.b16 %v37
    %v184 = vunpack.c.l.b16 %v38
    %v185 = vunpack.c.l.b16 %v39
    %v186 = vunpack.c.l.b16 %v40
    %v187 = vunpack.c.l.b16 %v41
    %v188 = vunpack.c.l.b16 %v42
    %v189 = vunpack.c.l.b16 %v43
    %v190 = vunpack.c.l.b16 %v44
    %v191 = vunpack.c.l.b16 %v45
    %v192 = vunpack.c.l.b16 %v46
    %v193 = vunpack.c.l.b16 %v47
    %v194 = vunpack.c.l.b16 %v48
    %v195 = vunpack.c.l.b16 %v49
    %v196 = vunpack.c.l.b16 %v50
    %v197 = vunpack.c.l.b16 %v51
    %v198 = vunpack.c.l.b16 %v52
    %v199 = vunpack.c.l.b16 %v53
    %v200 = vunpack.c.l.b16 %v54
    %v201 = vunpack.c.l.b16 %v55
    %v202 = vunpack.c.l.b16 %v56
    %v203 = vunpack.c.l.b16 %v57
    %v204 = vunpack.c.l.b16 %v58
    %v205 = vunpack.c.l.b16 %v59
    %v206 = vunpack.c.l.b16 %v60
    %v207 = vunpack.c.l.b16 %v61
    %v208 = vunpack.c.l.b16 %v62
    %v209 = vunpack.c.l.b16 %v63
    %v210 = vunpack.c.l.b16 %v64
    %v211 = vunpack.c.l.b16 %v65
    %v212 = vunpack.c.l.b16 %v66
    %v213 = vunpack.c.l.b16 %v67
    %v214 = vunpack.c.l.b16 %v68
    %v215 = vunpack.c.l.b16 %v69
    %v216 = vunpack.c.l.b16 %v70
    %v217 = vunpack.c.l.b16 %v71
    %v218 = vunpack.c.l.b16 %v72
    %v219 = vunpack.c.l.b16 %v73
    %v220 = vunpack.c.l.b16 %v74
    %v221 = vunpack.c.l.b16 %v75
    %v222 = vunpack.c.l.b16 %v76
    %v223 = vunpack.c.l.b16 %v77
    %v224 = vunpack.c.l.b16 %v78
    %v225 = vunpack.c.l.b16 %v79
    %v226 = vunpack.c.l.b16 %v80
    %v227 = vunpack.c.l.b16 %v81
    %v228 = vunpack.c.l.b16 %v82
    %v229 = vunpack.c.l.b16 %v83
    %v230 = vunpack.c.l.b16 %v84
    %v231 = vunpack.c.l.b16 %v85
    %v232 = vunpack.c.l.b16 %v86
    %v233 = vunpack.c.l.b16 %v87
    %v234 = vunpack.c.l.b16 %v88
    %v235 = vpack.c.b16 %v172, %v171
    %v236 = vpack.c.b16 %v174, %v173
    %v237 = vpack.c.b16 %v176, %v175
    %v238 = vpack.c.b16 %v178, %v177
    %v239 = vpack.c.b16 %v180, %v179
    %v240 = vpack.c.b16 %v182, %v181
    %v241 = vpack.c.b16 %v184, %v183
    %v242 = vpack.c.b16 %v186, %v185
    %v243 = vpack.c.b16 %v188, %v187
    %v244 = vpack.c.b16 %v190, %v189
    %v245 = vpack.c.b16 %v192, %v191
    %v246 = vpack.c.b16 %v194, %v193
    %v247 = vpack.c.b16 %v196, %v195
    %v248 = vpack.c.b16 %v198, %v197
    %v249 = vpack.c.b16 %v200, %v199
    %v250 = vpack.c.b16 %v202, %v201
    %v251 = vpack.c.b16 %v204, %v203
    %v252 = vpack.c.b16 %v206, %v205
    %v253 = vpack.c.b16 %v208, %v207
    %v254 = vpack.c.b16 %v210, %v209
    %v255 = vpack.c.b16 %v212, %v211
    %v256 = vpack.c.b16 %v214, %v213
    %v257 = vpack.c.b16 %v216, %v215
    %v258 = vpack.c.b16 %v218, %v217
    %v259 = vpack.c.b16 %v220, %v219
    %v260 = vpack.c.b16 %v222, %v221
    %v261 = vpack.c.b16 %v224, %v223
    %v262 = vpack.c.b16 %v226, %v225
    %v263 = vpack.c.b16 %v228, %v227
    %v264 = vpack.c.b16 %v230, %v229
    %v265 = vpack.c.b16 %v232, %v231
    %v266 = vpack.c.b16 %v234, %v233
    %299 = vmatpush.bf16.msra.mxu0 %v242
    %300 = vmatpush.bf16.msra.mxu0 %v241
    %301 = vmatpush.bf16.msra.mxu0 %v240
    %302 = vmatpush.bf16.msra.mxu0 %v239
    %303 = vmatpush.bf16.msra.mxu0 %v238
    %304 = vmatpush.bf16.msra.mxu0 %v237
    %305 = vmatpush.bf16.msra.mxu0 %v236
    %306 = vmatpush.bf16.msra.mxu0 %v235
    %307 = vmatmul.bf16.gmra.mxu0 %v99
    %v308 = vpop.f32.mrf.mxu0
    %v309 = vadd.f32 %v91, %v308
    %v310 = vpop.f32.mrf.mxu0
    %311 = vdwg.mxu0
    %312 = vmatpush.bf16.msra.mxu0 %v250
    %313 = vmatpush.bf16.msra.mxu0 %v249
    %314 = vmatpush.bf16.msra.mxu0 %v248
    %315 = vmatpush.bf16.msra.mxu0 %v247
    %316 = vmatpush.bf16.msra.mxu0 %v246
    %317 = vmatpush.bf16.msra.mxu0 %v245
    %318 = vmatpush.bf16.msra.mxu0 %v244
    %319 = vmatpush.bf16.msra.mxu0 %v243
    %320 = vmatmul.bf16.gmra.mxu0 %v100
    %v321 = vpop.f32.mrf.mxu0
    %v322 = vadd.f32 %v309, %v321
    %v323 = vpop.f32.mrf.mxu0
    %324 = vdwg.mxu0
    %325 = vmatpush.bf16.msra.mxu0 %v258
    %326 = vmatpush.bf16.msra.mxu0 %v257
    %327 = vmatpush.bf16.msra.mxu0 %v256
    %328 = vmatpush.bf16.msra.mxu0 %v255
    %329 = vmatpush.bf16.msra.mxu0 %v254
    %330 = vmatpush.bf16.msra.mxu0 %v253
    %331 = vmatpush.bf16.msra.mxu0 %v252
    %332 = vmatpush.bf16.msra.mxu0 %v251
    %333 = vmatmul.bf16.gmra.mxu0 %v101
    %v334 = vpop.f32.mrf.mxu0
    %v335 = vadd.f32 %v322, %v334
    %v336 = vpop.f32.mrf.mxu0
    %337 = vdwg.mxu0
    %338 = vmatpush.bf16.msra.mxu0 %v266
    %339 = vmatpush.bf16.msra.mxu0 %v265
    %340 = vmatpush.bf16.msra.mxu0 %v264
    %341 = vmatpush.bf16.msra.mxu0 %v263
    %342 = vmatpush.bf16.msra.mxu0 %v262
    %343 = vmatpush.bf16.msra.mxu0 %v261
    %344 = vmatpush.bf16.msra.mxu0 %v260
    %345 = vmatpush.bf16.msra.mxu0 %v259
    %346 = vmatmul.bf16.gmra.mxu0 %v102
    %v347 = vpop.f32.mrf.mxu0
    %v348 = vadd.f32 %v335, %v347
    %v349 = vpop.f32.mrf.mxu0
    %350 = vdwg.mxu0
    %v351 = vmul.f32 %v348, 0.2
    %v352 = vmax.f32 %v348, %v351
    %v353 = vld [vmem:[%s3] sm:$0x1]
    %v354 = vld [vmem:[#allocation2] sm:$0x1]
    %356 = vset.pattern.permute.xlu0 0
    %357 = vperm.xlu0 %356, %v354
    %v358 = vpop.permute.xlu0 %357
    %v360 = vperm.slane %v358, 0
    %vm361 = vcmask 261120
    %v363 = vsel %vm361, %v353, 0
    %v366 = vsel %vm361, %v352, 0
    %368 = vmatpush.xpose.msra.mxu0 0.0
    %369 = vmatpush.xpose.msra.mxu0 0.0
    %370 = vmatpush.xpose.msra.mxu0 0.0
    %371 = vmatpush.xpose.msra.mxu0 0.0
    %372 = vmatpush.xpose.msra.mxu0 0.0
    %373 = vmatpush.xpose.msra.mxu0 0.0
    %374 = vmatpush.xpose.msra.mxu0 0.0
    %375 = vmatpush.xpose.msra.mxu0 0.0
    %376 = vmatpush.xpose.msra.mxu0 0.0
    %377 = vmatpush.xpose.msra.mxu0 0.0
    %378 = vmatpush.xpose.msra.mxu0 0.0
    %379 = vmatpush.xpose.msra.mxu0 0.0
    %380 = vmatpush.xpose.msra.mxu0 0.0
    %381 = vmatpush.xpose.msra.mxu0 0.0
    %382 = vmatpush.xpose.msra.mxu0 0.0
    %383 = vmatpush.xpose.msra.mxu0 %v366
    %384 = vmatmul.f32.gmra.mxu0 %v363
    %v385 = vpop.f32.mrf.mxu0
    %v386 = vadd.f32 %v360, %v385
    %387 = vdwg.mxu0
    %v388 = vsub.f32 0.0, %v386
    %v389 = vmul.f32 %v388, 1.442695
    %v390 = vpow.pop %v389
    %v391 = vadd.f32 %v390, 1.0
    %v392 = vrcp.pop %v391
    %v393 = vmul.f32 %v391, %v392
    %v394 = vsub.f32 1.0, %v393
    %v395 = vmul.f32 %v392, %v394
    %v396 = vadd.f32 %v392, %v395
    %vm397 = vweird.f32 %v391
    %vm398 = vweird.f32 %v392
    %vm399 = vmor %vm397, %vm398
    %v400 = vsel %vm399, %v392, %v396
    %v401 = vand.u32 2147483647, %v391
    %vm402 = vcmp.eq.f32.partialorder %v401, 8.507059e+37
    %v403 = vand.u32 %v391, 2147483648
    %v404 = vor.u32 1.1754944e-38, %v403
    %v405 = vsel %vm402, %v404, %v400
    %v406 = vmul.f32 1.0, %v405
    %vm407 = vcmask 57344
    %408 = vst.msk [vmem:[#allocation3] sm:$0x1] %vm407, %v406
    // Predicated region
    $region22: #{tpu_custom_call.1} parent=1 // pred_check
      _
    $region23: #{tpu_custom_call.1} parent=1 // pred_check_branch
      %410 = sbr.rel (0) target = $region25
    $region24: #{tpu_custom_call.1} parent=1 // pred_region
      %412 = vsyncadd [#allocation4], 0
      %s414 = sshll.u32 [#allocation3], 4
      %s415 = int_to_ptr.vmem [resolvable:$true] %s414
      %s416 = sshll.u32 %s5, 4
      %s417 = int_to_ptr.hbm [resolvable:$true] %s416
      %419 = dma.vmem_to_hbm [thread:$0]  %s415, 16, %s417, [#allocation4]
    $region25: #{tpu_custom_call.1} parent=1 // pred_fallthru
      _
    // Predicated region
    $region26: #{tpu_custom_call.1} parent=1 // pred_check
      _
    $region27: #{tpu_custom_call.1} parent=1 // pred_check_branch
      %421 = sbr.rel (0) target = $region29
    $region28: #{tpu_custom_call.1} parent=1 // pred_region
      %423 = dma.done [#allocation4], 16
    $region29: #{tpu_custom_call.1} parent=1 // pred_fallthru
      _
    %424 = vsyncpa [#allocation4], 1

</llo_original>
